<compile_context>
chip_gen: v7x
topology: tpu7x:2x2x1
jax: 0.10.0
libtpu: 0.0.40
codegen_flags: <defaults>
</compile_context>

<pallas_src>
import functools

import jax
import jax.numpy as jnp
from jax.experimental import pallas as pl
from jax.experimental.pallas import tpu as pltpu


def _round_up(x, m):
    return (x + m - 1) // m * m


def _cdiv(a, b):
    return (a + b - 1) // b


def _classifier_kernel(x_ref, w_ref, b_ref, o_ref, acc_ref, *, inv_t):
    # x_ref: (tb, tt, D)   w_ref: (D, C_pad)   b_ref: (1, C_pad)
    # o_ref: (tb, C_pad)   acc_ref: (tb, C_pad) f32 scratch
    k = pl.program_id(1)

    @pl.when(k == 0)
    def _init():
        acc_ref[...] = jnp.zeros_like(acc_ref)

    # Temporal partial sum in f32 (VALU has slack here; avoids bf16 drift for
    # large T), then contract on D against the pre-transposed (D, C_pad) weight.
    xs = jnp.sum(x_ref[...].astype(jnp.float32), axis=1)            # (tb, D)
    acc_ref[...] += jnp.dot(xs, w_ref[...],
                            preferred_element_type=jnp.float32)     # (tb, C_pad)

    @pl.when(k == pl.num_programs(1) - 1)
    def _finalize():
        y = acc_ref[...] * inv_t + b_ref[...].astype(jnp.float32)
        o_ref[...] = y.astype(o_ref.dtype)


def _choose_tiles(B, T, D, c_pad, x_item, out_item, resident_bytes):
    """Pick (tb, tt) from an explicit, generation-safe VMEM plan."""
    budget = 32 << 20                       # fits v5e/v6e defaults and v7x 64 MiB/TC
    avail = max(budget - resident_bytes, 2 << 20)

    # Temporal chunk: largest of {T} U {multiples of 8 that divide T} whose
    # minimal (8, tt, D) double-buffered x block fits.  Exact divisors only, so
    # no out-of-bounds rows ever enter the temporal sum.
    candidates = [T]
    d = (T // 8) * 8
    while d >= 8:
        if d != T and T % d == 0:
            candidates.append(d)
        d -= 8
    tt = candidates[-1]
    for cand in candidates:
        if 2 * 8 * cand * D * x_item <= avail:
            tt = cand
            break

    # Batch tile: as big as the remaining budget allows, but keep ~8 grid steps
    # on the parallel axis for large B (pipelining + megacore / v7x dual-TC).
    per_row = (2 * tt * D * x_item          # double-buffered x block
               + 2 * c_pad * out_item       # double-buffered output block
               + 4 * c_pad)                 # f32 accumulator scratch
    tb_budget = max((avail // per_row) // 8 * 8, 8)
    tb_parallel = max(_round_up(_cdiv(B, 8), 8), 8)
    tb = min(tb_budget, tb_parallel)
    if tb >= B:
        tb = B                              # single full-extent batch block (always legal)
    return tb, tt


def video_classifier_forward(x, weight, bias):
    """x: (B, T, D); weight: (C, D); bias: (C,). Returns mean_T(x) @ W^T + b, shape (B, C)."""
    B, T, D = x.shape
    C = weight.shape[0]
    c_pad = _round_up(C, 128)               # lane-dense output / weight minor dim

    # One-time (cheap: C*D elements) transpose + pad of the weight to (D, C_pad);
    # removes any per-step transpose of the weight tile inside the kernel.
    w_t = weight.T
    b_row = bias.reshape(1, C)
    if c_pad != C:
        w_t = jnp.pad(w_t, ((0, 0), (0, c_pad - C)))
        b_row = jnp.pad(b_row, ((0, 0), (0, c_pad - C)))

    x_item = jnp.dtype(x.dtype).itemsize
    out_item = jnp.dtype(x.dtype).itemsize
    w_bytes = D * c_pad * jnp.dtype(w_t.dtype).itemsize
    bias_bytes = c_pad * jnp.dtype(b_row.dtype).itemsize

    tb, tt = _choose_tiles(B, T, D, c_pad, x_item, out_item, w_bytes + bias_bytes)
    grid_b = _cdiv(B, tb)
    grid_t = T // tt
    b_out = grid_b * tb                      # >= B; extra rows sliced off below

    # Single-buffer the resident weight only when it is big enough for the saved
    # VMEM to matter (constant index_map => it is fetched once either way).
    resident_kw = dict(pipeline_mode=pl.Buffered(1)) if w_bytes >= (2 << 20) else {}

    plan_bytes = (2 * tb * tt * D * x_item
                  + w_bytes + bias_bytes
                  + 2 * tb * c_pad * out_item
                  + 4 * tb * c_pad)
    vmem_limit_bytes = int(min(max(plan_bytes + (4 << 20), 16 << 20), 48 << 20))

    out = pl.pallas_call(
        functools.partial(_classifier_kernel, inv_t=1.0 / T),
        out_shape=jax.ShapeDtypeStruct((b_out, c_pad), x.dtype),
        grid_spec=pltpu.PrefetchScalarGridSpec(
            num_scalar_prefetch=0,
            grid=(grid_b, grid_t),
            in_specs=[
                # Streamed x tiles: full T-chunk and full (unpadded) D extent.
                pl.BlockSpec((tb, tt, D), lambda i, k: (i, k, 0)),
                # Resident (D, C_pad) weight and (1, C_pad) bias.
                pl.BlockSpec((D, c_pad), lambda i, k: (0, 0), **resident_kw),
                pl.BlockSpec((1, c_pad), lambda i, k: (0, 0)),
            ],
            out_specs=pl.BlockSpec((tb, c_pad), lambda i, k: (i, 0)),
            scratch_shapes=[pltpu.VMEM((tb, c_pad), jnp.float32)],
        ),
        compiler_params=pltpu.CompilerParams(
            dimension_semantics=("parallel", "arbitrary"),
            vmem_limit_bytes=vmem_limit_bytes),
    )(x, w_t, b_row)

    # TODO(synk): for sub-32-bit x with small T, flatten T into the lane axis
    # (reshape to (B, T*D) when D % 128 == 0) so packed vregs stay dense.
    return out[:B, :C]


if __name__ == "__main__":
    # Small shapes consistent with the module: batch=2, seq=8, input_dim=32,
    # num_classes=16.
    B, T, D, C = 2, 8, 32, 16

    key = jax.random.PRNGKey(0)
    kx, kw, kb = jax.random.split(key, 3)

    x = jax.random.normal(kx, (B, T, D), dtype=jnp.float32)
    # Deterministic parameter init (mimics nn.Linear's uniform(-1/sqrt(D), 1/sqrt(D))).
    bound = 1.0 / jnp.sqrt(jnp.float32(D))
    weight = jax.random.uniform(kw, (C, D), minval=-bound, maxval=bound,
                                dtype=jnp.float32)
    bias = jax.random.uniform(kb, (C,), minval=-bound, maxval=bound,
                              dtype=jnp.float32)

    out = video_classifier_forward(x, weight, bias)
    out = jax.block_until_ready(out)

    # Reference check in plain JAX (same semantics as the PyTorch forward).
    ref = jnp.mean(x, axis=1) @ weight.T + bias
    assert out.shape == (B, C)
    assert jnp.allclose(out, ref, atol=1e-5, rtol=1e-5), "mismatch vs reference"

    print("KERNEL_OK")
</pallas_src>

<mosaic_0001>
module attributes {stable_mosaic.version = 11 : i64} {
  func.func @_classifier_kernel(%arg0: i32, %arg1: i32, %arg2: memref<2x8x32xf32, #tpu.memory_space<vmem>>, %arg3: memref<32x128xf32, #tpu.memory_space<vmem>>, %arg4: memref<1x128xf32, #tpu.memory_space<vmem>>, %arg5: memref<2x128xf32, #tpu.memory_space<vmem>>, %arg6: memref<2x128xf32, #tpu.memory_space<vmem>>) attributes {dimension_semantics = [#tpu.dimension_semantics<parallel>, #tpu.dimension_semantics<arbitrary>], iteration_bounds = array<i64: 1, 1>, scalar_prefetch = 0 : i64, scratch_operands = 1 : i64, tpu.core_type = #tpu.core_type<tc>, window_params = [{transform_indices = @transform_0, window_bounds = array<i64: 2, 8, 32>}, {pipeline_mode = #tpu.pipeline_mode<synchronous>, transform_indices = @transform_1, window_bounds = array<i64: 32, 128>}, {pipeline_mode = #tpu.pipeline_mode<synchronous>, transform_indices = @transform_2, window_bounds = array<i64: 1, 128>}, {transform_indices = @transform_3, window_bounds = array<i64: 2, 128>}]} {
    %c0_i32 = arith.constant 0 : i32
    %0 = arith.cmpi eq, %arg1, %c0_i32 : i32
    %1 = arith.extui %0 : i1 to i32
    %c0_i32_0 = arith.constant 0 : i32
    %2 = arith.cmpi ne, %1, %c0_i32_0 : i32
    scf.if %2 {
      %cst_12 = arith.constant 0.000000e+00 : f32
      %13 = vector.broadcast %cst_12 : f32 to vector<2x128xf32>
      %c0_13 = arith.constant 0 : index
      %c0_14 = arith.constant 0 : index
      %14 = vector.load %arg6[%c0_13, %c0_14] : memref<2x128xf32, #tpu.memory_space<vmem>>, vector<2x128xf32>
      tpu.vector_store %arg6[%c0_13, %c0_14], %13 {strides = array<i32>} : memref<2x128xf32, #tpu.memory_space<vmem>>, vector<2x128xf32>,
    } else {
    }
    %c0 = arith.constant 0 : index
    %c0_1 = arith.constant 0 : index
    %c0_2 = arith.constant 0 : index
    %3 = vector.load %arg2[%c0, %c0_1, %c0_2] : memref<2x8x32xf32, #tpu.memory_space<vmem>>, vector<2x8x32xf32>
    %cst = arith.constant dense<0.000000e+00> : vector<2x32xf32>
    %4 = vector.multi_reduction <add>, %3, %cst [1] : vector<2x8x32xf32> to vector<2x32xf32>
    %c0_3 = arith.constant 0 : index
    %c0_4 = arith.constant 0 : index
    %5 = vector.load %arg6[%c0_3, %c0_4] : memref<2x128xf32, #tpu.memory_space<vmem>>, vector<2x128xf32>
    %c0_5 = arith.constant 0 : index
    %c0_6 = arith.constant 0 : index
    %6 = vector.load %arg3[%c0_5, %c0_6] : memref<32x128xf32, #tpu.memory_space<vmem>>, vector<32x128xf32>
    %cst_7 = arith.constant dense<0.000000e+00> : vector<2x128xf32>
    %7 = tpu.matmul %4, %6, %cst_7 {dimension_numbers = #tpu.dot_dimension_numbers<[1], [0], [0], [1], [0, 0, 1, 1], [], []>} : vector<2x32xf32>, vector<32x128xf32>, vector<2x128xf32> -> vector<2x128xf32>
    %8 = arith.addf %5, %7 : vector<2x128xf32>
    %c0_8 = arith.constant 0 : index
    %c0_9 = arith.constant 0 : index
    %9 = vector.load %arg6[%c0_8, %c0_9] : memref<2x128xf32, #tpu.memory_space<vmem>>, vector<2x128xf32>
    tpu.vector_store %arg6[%c0_8, %c0_9], %8 {strides = array<i32>} : memref<2x128xf32, #tpu.memory_space<vmem>>, vector<2x128xf32>,
    %c0_i32_10 = arith.constant 0 : i32
    %10 = arith.cmpi eq, %arg1, %c0_i32_10 : i32
    %11 = arith.extui %10 : i1 to i32
    %c0_i32_11 = arith.constant 0 : i32
    %12 = arith.cmpi ne, %11, %c0_i32_11 : i32
    scf.if %12 {
      %c0_12 = arith.constant 0 : index
      %c0_13 = arith.constant 0 : index
      %13 = vector.load %arg6[%c0_12, %c0_13] : memref<2x128xf32, #tpu.memory_space<vmem>>, vector<2x128xf32>
      %cst_14 = arith.constant 1.250000e-01 : f32
      %14 = vector.broadcast %cst_14 : f32 to vector<2x128xf32>
      %15 = arith.mulf %13, %14 : vector<2x128xf32>
      %c0_15 = arith.constant 0 : index
      %c0_16 = arith.constant 0 : index
      %16 = vector.load %arg4[%c0_15, %c0_16] : memref<1x128xf32, #tpu.memory_space<vmem>>, vector<1x128xf32>
      %17 = vector.broadcast %16 : vector<1x128xf32> to vector<2x128xf32>
      %18 = arith.addf %15, %17 : vector<2x128xf32>
      %c0_17 = arith.constant 0 : index
      %c0_18 = arith.constant 0 : index
      %19 = vector.load %arg5[%c0_17, %c0_18] : memref<2x128xf32, #tpu.memory_space<vmem>>, vector<2x128xf32>
      tpu.vector_store %arg5[%c0_17, %c0_18], %18 {strides = array<i32>} : memref<2x128xf32, #tpu.memory_space<vmem>>, vector<2x128xf32>,
    } else {
    }
    return
  }
  func.func @transform_0(%arg0: i32, %arg1: i32) -> (i32, i32, i32) {
    %c0_i32 = arith.constant 0 : i32
    %c0_i32_0 = arith.constant 0 : i32
    return %arg0, %arg1, %c0_i32 : i32, i32, i32
  }
  func.func @transform_1(%arg0: i32, %arg1: i32) -> (i32, i32) {
    %c0_i32 = arith.constant 0 : i32
    %c0_i32_0 = arith.constant 0 : i32
    %c0_i32_1 = arith.constant 0 : i32
    return %c0_i32, %c0_i32_0 : i32, i32
  }
  func.func @transform_2(%arg0: i32, %arg1: i32) -> (i32, i32) {
    %c0_i32 = arith.constant 0 : i32
    %c0_i32_0 = arith.constant 0 : i32
    %c0_i32_1 = arith.constant 0 : i32
    return %c0_i32, %c0_i32_0 : i32, i32
  }
  func.func @transform_3(%arg0: i32, %arg1: i32) -> (i32, i32) {
    %c0_i32 = arith.constant 0 : i32
    %c0_i32_0 = arith.constant 0 : i32
    return %arg0, %c0_i32 : i32, i32
  }
}

</mosaic_0001>

<llo_original>
// kernel: tpu_custom_call.1
$region0: #{tpu_custom_call.1}
  #allocation0 [shape = 'u32[]', space=smem, size = 0x4, offset = 0x4, fixed_abs, tag = 'smem constant byte address 0x4 - core index']
  #allocation1 [shape = 'u32[144,128]{1,0:T(1,128)}', space=vmem, size = 0x12000, scoped, tag = 'internal scratch']
  #allocation2 [shape = 'f32[2,128]{1,0:T(2,128)}', space=vmem, size = 0x400, scoped, tag = 'scratch operand']
  %s0 = inlined_call_operand.hbm [shape: f32[2,8,32], index: 0, kind: input, shape index: {}]
  %s1 = inlined_call_operand.hbm [shape: f32[32,128], index: 1, kind: input, shape index: {}]
  %s2 = inlined_call_operand.vmem [shape: f32[1,128], index: 2, kind: input, shape index: {}]
  %s3 = inlined_call_operand.hbm [shape: f32[2,128], index: 3, kind: output, shape index: {}]
  %s4 = sld [smem:[#allocation0]]
  $region38: #{tpu_custom_call.1} parent=0
    _
  %s6 = ssub.s32 1, %s4
  %s7 = scalar_select 0, %s6, %s4
  $region1: #{tpu_custom_call.1} parent=0
    #allocation3 [shape = 'u8[8192]{0}', space=vmem, size = 0x2000, scoped, tag = 'input window, operand 0, single buffered']
    #allocation4 [shape = 's32[1]{0}', space=sflag, size = 0x4, scoped, tag = 'scoped memory for tpu_custom_call.1']
    #allocation5 [shape = 's32[1]{0}', space=sflag, size = 0x4, scoped, tag = 'scoped memory for tpu_custom_call.1']
    #allocation6 [shape = 'u8[16384]{0}', space=vmem, size = 0x4000, scoped, tag = 'input window, operand 1, single buffered']
    #allocation7 [shape = 's32[1]{0}', space=sflag, size = 0x4, scoped, tag = 'scoped memory for tpu_custom_call.1']
    #allocation8 [shape = 'u8[1024]{0}', space=vmem, size = 0x400, scoped, tag = 'output window, operand 0, single buffered']
    %8 = vsyncpa [#allocation4], 0
    %9 = vsyncpa [#allocation7], 0
    %10 = vsyncpa [#allocation5], 0
    // Predicated region
    $region2: #{tpu_custom_call.1} parent=1 // pred_check
      _
    $region3: #{tpu_custom_call.1} parent=1 // pred_check_branch
      %12 = sbr.rel (0) target = $region5
    $region4: #{tpu_custom_call.1} parent=1 // pred_region
      %s14 = ssub.s32 256, 256
      %15 = vsyncadd [#allocation4], %s14
      %s16 = sshll.u32 [#allocation3], 4
      %s17 = int_to_ptr.vmem [resolvable:$true] %s16
      %22 = dma.hbm_to_vmem [thread:$0]  %s0, 256, %s17, [#allocation4], 128, 128, 8
    $region5: #{tpu_custom_call.1} parent=1 // pred_fallthru
      _
    // Predicated region
    $region6: #{tpu_custom_call.1} parent=1 // pred_check
      _
    $region7: #{tpu_custom_call.1} parent=1 // pred_check_branch
      %24 = sbr.rel (0) target = $region9
    $region8: #{tpu_custom_call.1} parent=1 // pred_region
      %s26 = ssub.s32 512, 512
      %27 = vsyncadd [#allocation7], %s26
      %s28 = sshll.u32 [#allocation6], 4
      %s29 = int_to_ptr.vmem [resolvable:$true] %s28
      %34 = dma.hbm_to_vmem [thread:$0]  %s1, 512, %s29, [#allocation7], 128, 128, 8
    $region9: #{tpu_custom_call.1} parent=1 // pred_fallthru
      _
    // Predicated region
    $region10: #{tpu_custom_call.1} parent=1 // pred_check
      _
    $region11: #{tpu_custom_call.1} parent=1 // pred_check_branch
      %36 = sbr.rel (0) target = $region13
    $region12: #{tpu_custom_call.1} parent=1 // pred_region
      _
    $region13: #{tpu_custom_call.1} parent=1 // pred_fallthru
      _
    // Predicated region
    $region14: #{tpu_custom_call.1} parent=1 // pred_check
      _
    $region15: #{tpu_custom_call.1} parent=1 // pred_check_branch
      %38 = sbr.rel (0) target = $region17
    $region16: #{tpu_custom_call.1} parent=1 // pred_region
      %39 = dma.done [#allocation4], 256
    $region17: #{tpu_custom_call.1} parent=1 // pred_fallthru
      _
    // Predicated region
    $region18: #{tpu_custom_call.1} parent=1 // pred_check
      _
    $region19: #{tpu_custom_call.1} parent=1 // pred_check_branch
      %41 = sbr.rel (0) target = $region21
    $region20: #{tpu_custom_call.1} parent=1 // pred_region
      %42 = dma.done [#allocation7], 512
    $region21: #{tpu_custom_call.1} parent=1 // pred_fallthru
      _
    %p43 = scmp.eq.s32.totalorder 0, 0
    // Predicated region
    $region22: #{tpu_custom_call.1} parent=1 // pred_check
      %p44 = pneg %p43
    $region23: #{tpu_custom_call.1} parent=1 // pred_check_branch
      %46 = sbr.rel (%p44) target = $region25
    $region24: #{tpu_custom_call.1} parent=1 // pred_region
      %47 = vst [vmem:[#allocation2] sm:$0x3] 0.0
    $region25: #{tpu_custom_call.1} parent=1 // pred_fallthru
      _
    %v48 = vld [vmem:[#allocation3] sm:$0xff]
    %v49 = vld [vmem:[#allocation3 + $0x8] sm:$0xff]
    %vm50 = vcmask 261120
    %v51 = vsel %vm50, %v48, 0.0
    %v52 = vrot.slane %v51, 4
    %v53 = vadd.f32 %v51, %v52
    %v54 = vrot.slane %v53, 2
    %v55 = vadd.f32 %v53, %v54
    %v56 = vrot.slane %v55, 1
    %v57 = vadd.f32 %v55, %v56
    %v58 = vsel %vm50, %v49, 0.0
    %v59 = vrot.slane %v58, 4
    %v60 = vadd.f32 %v58, %v59
    %v61 = vrot.slane %v60, 2
    %v62 = vadd.f32 %v60, %v61
    %v63 = vrot.slane %v62, 1
    %v64 = vadd.f32 %v62, %v63
    %v65 = vld [vmem:[#allocation2] sm:$0x3]
    %v66 = vld [vmem:[#allocation6] sm:$0xff]
    %v67 = vld [vmem:[#allocation6 + $0x8] sm:$0xff]
    %v68 = vld [vmem:[#allocation6 + $0x10] sm:$0xff]
    %v69 = vld [vmem:[#allocation6 + $0x18] sm:$0xff]
    %vm72 = vcmask 1041409
    %v73 = vsel %vm72, %v64, %v57
    %v74 = vsel %vm50, %v73, 0
    %76 = vmatprep.subr.mxu0 0.0
    %77 = vmatpush1.msra.mxu0 %v66
    %78 = vmatprep.subr.mxu0 0.0
    %79 = vmatpush1.msra.mxu0 %v67
    %80 = vmatprep.subr.mxu0 0.0
    %81 = vmatpush1.msra.mxu0 %v68
    %82 = vmatprep.subr.mxu0 0.0
    %83 = vmatpush1.msra.mxu0 %v69
    %84 = vmatprep.subr.mxu0 0.0
    %85 = vmatpush1.msra.mxu0 0.0
    %86 = vmatprep.subr.mxu0 0.0
    %87 = vmatpush1.msra.mxu0 0.0
    %88 = vmatprep.subr.mxu0 0.0
    %89 = vmatpush1.msra.mxu0 0.0
    %90 = vmatprep.subr.mxu0 0.0
    %91 = vmatpush1.msra.mxu0 0.0
    %92 = vmatprep.subr.mxu0 0.0
    %93 = vmatpush1.msra.mxu0 0.0
    %94 = vmatprep.subr.mxu0 0.0
    %95 = vmatpush1.msra.mxu0 0.0
    %96 = vmatprep.subr.mxu0 0.0
    %97 = vmatpush1.msra.mxu0 0.0
    %98 = vmatprep.subr.mxu0 0.0
    %99 = vmatpush1.msra.mxu0 0.0
    %100 = vmatprep.subr.mxu0 0.0
    %101 = vmatpush1.msra.mxu0 0.0
    %102 = vmatprep.subr.mxu0 0.0
    %103 = vmatpush1.msra.mxu0 0.0
    %104 = vmatprep.subr.mxu0 0.0
    %105 = vmatpush1.msra.mxu0 0.0
    %106 = vmatprep.subr.mxu0 0.0
    %107 = vmatpush1.msra.mxu0 0.0
    %108 = vmatprep.subr.mxu0 0.0
    %109 = vmatpush1.msra.mxu0 0.0
    %110 = vmatprep.subr.mxu0 0.0
    %111 = vmatpush1.msra.mxu0 0.0
    %112 = vmatprep.subr.mxu0 0.0
    %113 = vmatpush1.msra.mxu0 0.0
    %114 = vmatprep.subr.mxu0 0.0
    %115 = vmatpush1.msra.mxu0 0.0
    %116 = vmatprep.subr.mxu0 0.0
    %117 = vmatpush1.msra.mxu0 0.0
    %118 = vmatprep.subr.mxu0 0.0
    %119 = vmatpush1.msra.mxu0 0.0
    %120 = vmatprep.subr.mxu0 0.0
    %121 = vmatpush1.msra.mxu0 0.0
    %122 = vmatprep.subr.mxu0 0.0
    %123 = vmatpush1.msra.mxu0 0.0
    %124 = vmatprep.subr.mxu0 0.0
    %125 = vmatpush1.msra.mxu0 0.0
    %126 = vmatprep.subr.mxu0 0.0
    %127 = vmatpush1.msra.mxu0 0.0
    %128 = vmatprep.subr.mxu0 0.0
    %129 = vmatpush1.msra.mxu0 0.0
    %130 = vmatprep.subr.mxu0 0.0
    %131 = vmatpush1.msra.mxu0 0.0
    %132 = vmatprep.subr.mxu0 0.0
    %133 = vmatpush1.msra.mxu0 0.0
    %134 = vmatprep.subr.mxu0 0.0
    %135 = vmatpush1.msra.mxu0 0.0
    %136 = vmatprep.subr.mxu0 0.0
    %137 = vmatpush1.msra.mxu0 0.0
    %138 = vmatprep.subr.mxu0 0.0
    %139 = vmatpush1.msra.mxu0 0.0
    %140 = vmatprep.mubr.f32.mxu0 0.0
    %141 = vmatmul.mubr.f32.gmra.mrb[0].mxu0 %v74
    %v142 = vpop.f32.mrb[0].mxu0
    %v143 = vadd.f32 0.0, %v142
    %v144 = vpop.f32.mrb[0].mxu0
    %145 = vdwg.mxu0
    %v146 = vadd.f32 %v65, %v143
    %147 = vst [vmem:[#allocation2] sm:$0x3] %v146
    // Predicated region
    $region26: #{tpu_custom_call.1} parent=1 // pred_check
      %p148 = pneg %p43
    $region27: #{tpu_custom_call.1} parent=1 // pred_check_branch
      %150 = sbr.rel (%p148) target = $region29
    $region28: #{tpu_custom_call.1} parent=1 // pred_region
      %v151 = vld [vmem:[#allocation2] sm:$0x3]
      %v152 = vmul.f32 %v151, 0.125
      %v153 = vld [vmem:[%s2] sm:$0x1]
      %v155 = vlaneseq
      %v156 = vshrl.u32 %v155, 7
      %v157 = vsub.s32 0, %v156
      %v158 = vrot.slane %v153, %v157
      %v160 = vadd.f32 %v152, %v158
      %161 = vst [vmem:[#allocation8] sm:$0x3] %v160
    $region29: #{tpu_custom_call.1} parent=1 // pred_fallthru
      _
    // Predicated region
    $region30: #{tpu_custom_call.1} parent=1 // pred_check
      _
    $region31: #{tpu_custom_call.1} parent=1 // pred_check_branch
      %163 = sbr.rel (0) target = $region33
    $region32: #{tpu_custom_call.1} parent=1 // pred_region
      %s165 = ssub.s32 32, 32
      %166 = vsyncadd [#allocation5], %s165
      %s168 = sshll.u32 [#allocation8], 4
      %s169 = int_to_ptr.vmem [resolvable:$true] %s168
      %171 = dma.vmem_to_hbm [thread:$0]  %s169, 32, %s3, [#allocation5]
    $region33: #{tpu_custom_call.1} parent=1 // pred_fallthru
      _
    // Predicated region
    $region34: #{tpu_custom_call.1} parent=1 // pred_check
      _
    $region35: #{tpu_custom_call.1} parent=1 // pred_check_branch
      %173 = sbr.rel (0) target = $region37
    $region36: #{tpu_custom_call.1} parent=1 // pred_region
      %174 = dma.done [#allocation5], 32
    $region37: #{tpu_custom_call.1} parent=1 // pred_fallthru
      _
    %175 = vsyncpa [#allocation4], 1
    %176 = vsyncpa [#allocation7], 1
    %177 = vsyncpa [#allocation5], 1

</llo_original>
